<compile_context>
chip_gen: v5e
topology: v5e:2x2
jax: 0.10.0
libtpu: 0.0.40
codegen_flags: <defaults>
</compile_context>

<pallas_src>
import functools

import jax
import jax.numpy as jnp
from jax import lax
from jax.experimental import pallas as pl
from jax.experimental.pallas import tpu as pltpu

_LANES = 128
_SUBLANES = 8


def _lane_partial(v, tile_n):
    """(1, tile_n) f32 -> (1, 1, 128) lane-parallel partial sum.

    The 128 lanes of the result sum to sum(v); the final cross-lane collapse
    is left to the (tiny) wrapper reduction.
    """
    if tile_n % _LANES == 0:
        s = v[:, 0:_LANES]
        for k in range(1, tile_n // _LANES):           # static, unrolled VPU adds
            s = s + v[:, k * _LANES:(k + 1) * _LANES]
        return s.reshape(1, 1, _LANES)
    # Single sub-128 tile (tile_n == N < 128): scalar total placed in lane 0.
    lane = lax.broadcasted_iota(jnp.int32, (1, 1, _LANES), 2)
    return jnp.where(lane == 0, jnp.sum(v), 0.0)


def _ce_partial_kernel(logits_t_ref, target_ref, partial_ref, *, tile_n, n_true):
    # logits_t_ref: (C, tile_n) native dtype in VMEM, batch on lanes.
    # target_ref  : (1, tile_n) int32 in VMEM, lane-dense.
    # partial_ref : (1, 1, 128) f32 per-lane partial NLL sums for this tile.
    i = pl.program_id(0)
    last = pl.num_programs(0) - 1

    x = logits_t_ref[...].astype(jnp.float32)            # (C, TN)
    t = target_ref[...]                                  # (1, TN)

    # Numerically-stable shifted logits; all class reductions are sublane
    # reductions producing lane-dense (1, TN) rows.
    m = jnp.max(x, axis=0, keepdims=True)                # (1, TN)
    z = x - m                                            # (C, TN)

    # Fused target gather on shifted logits via sublane-iota one-hot.
    cls = lax.broadcasted_iota(jnp.int32, z.shape, 0)    # (C, TN)
    picked_z = jnp.sum(jnp.where(cls == t, z, 0.0), axis=0, keepdims=True)
    lse_z = jnp.log(jnp.sum(jnp.exp(z), axis=0, keepdims=True))
    nll = lse_z - picked_z                               # (1, TN)

    # Full tiles: no masking work at all.
    @pl.when(i != last)
    def _():
        partial_ref[...] = _lane_partial(nll, tile_n)

    # Last (possibly partial) tile: drop lanes past the true batch size.
    @pl.when(i == last)
    def _():
        col = lax.broadcasted_iota(jnp.int32, nll.shape, 1) + i * tile_n
        partial_ref[...] = _lane_partial(jnp.where(col < n_true, nll, 0.0),
                                         tile_n)


def cross_entropy_loss(output, target, *, tile_n=None, vmem_budget_bytes=None):
    """output: (N, C) float logits (any float dtype), target: (N,) int class
    indices -> scalar f32 mean cross-entropy."""
    n, c = output.shape
    dtype_bytes = jnp.dtype(output.dtype).itemsize

    # Lane-dense layout: batch on the 128-lane axis, classes on sublanes.
    # (One small N*C relayout; no full-tensor padding pass.)
    logits_t = output.T                                   # (C, N)
    tgt = target.astype(jnp.int32).reshape(1, n)          # (1, N)

    # --- generation-aware VMEM limit & tile size (padded accounting) ---
    try:
        vmem_cap = int(getattr(pltpu.get_tpu_info(), "vmem_capacity_bytes",
                               64 << 20))
    except Exception:  # be conservative (v7x-sized VMEM) if the query fails
        vmem_cap = 64 << 20
    small_vmem = vmem_cap <= (64 << 20)                   # v7x: 64 MiB / TC
    vmem_limit = (48 << 20) if small_vmem else (64 << 20)

    c_sub = ((c + _SUBLANES - 1) // _SUBLANES) * _SUBLANES   # sublane-padded C
    # Per-sample (per lane column) VMEM bytes: 2x double-buffered native-dtype
    # input rows + ~5 f32 temporaries of the same shape + small lane rows.
    per_col = c_sub * (2 * dtype_bytes + 5 * 4) + 32

    if tile_n is None:
        budget = vmem_budget_bytes
        if budget is None:
            budget = (vmem_limit * 2) // 3
        row_cap = 4096 if small_vmem else 8192
        tile_n = max(_LANES,
                     min(row_cap, (budget // per_col // _LANES) * _LANES))
    tile_n = int(tile_n)

    if tile_n >= n or n <= _LANES:
        tile_n = n                                        # single full-batch tile
    else:
        tile_n = max(_LANES, (tile_n // _LANES) * _LANES)
        if n >= 2 * _LANES:
            # Ensure >= 2 tiles so the "parallel" batch axis can shard across
            # both v7x TensorCores (harmless on single-core chips).
            half = ((pl.cdiv(n, 2) + _LANES - 1) // _LANES) * _LANES
            tile_n = min(tile_n, half)
        tile_n = min(tile_n, n)

    num_tiles = pl.cdiv(n, tile_n)

    kernel = functools.partial(_ce_partial_kernel, tile_n=tile_n, n_true=n)

    cost = pl.CostEstimate(
        flops=5 * n * c,
        transcendentals=n * c + n,
        bytes_accessed=n * c * dtype_bytes + n * 4 + num_tiles * _LANES * 4,
    )

    partials = pl.pallas_call(
        kernel,
        out_shape=jax.ShapeDtypeStruct((num_tiles, 1, _LANES), jnp.float32),
        grid_spec=pltpu.PrefetchScalarGridSpec(
            num_scalar_prefetch=0,
            grid=(num_tiles,),
            in_specs=[
                pl.BlockSpec((c, tile_n), lambda i: (0, i)),   # logits^T
                pl.BlockSpec((1, tile_n), lambda i: (0, i)),   # targets
            ],
            out_specs=pl.BlockSpec((1, 1, _LANES), lambda i: (i, 0, 0)),
        ),
        compiler_params=pltpu.CompilerParams(
            dimension_semantics=("parallel",),
            vmem_limit_bytes=vmem_limit,
        ),
        cost_estimate=cost,
    )(logits_t, tgt)

    # Tiny final collapse: per-tile, per-lane partial sums -> mean.
    return (jnp.sum(partials) / n).astype(jnp.float32)


def _reference(output, target):
    logp = jax.nn.log_softmax(output.astype(jnp.float32), axis=-1)
    return -jnp.mean(jnp.take_along_axis(logp, target[:, None], axis=-1))


if __name__ == "__main__":
    key = jax.random.PRNGKey(0)
    k1, k2, k3, k4 = jax.random.split(key, 4)

    # Primary MNIST-like case: small batch, 10-class logits, single tile.
    N, C = 8, 10
    output = jax.random.normal(k1, (N, C), dtype=jnp.float32)
    target = jax.random.randint(k2, (N,), 0, C, dtype=jnp.int32)

    loss = cross_entropy_loss(output, target)
    jax.block_until_ready(loss)
    ref = _reference(output, target)
    assert jnp.allclose(loss, ref, atol=1e-5, rtol=1e-5), (loss, ref)

    # Multi-tile case: exercises the batch grid, the trailing partial block
    # (no wrapper padding) with last-step masking, and a non-f32 input dtype.
    N2, C2 = 300, 10
    output2 = jax.random.normal(k3, (N2, C2), dtype=jnp.bfloat16)
    target2 = jax.random.randint(k4, (N2,), 0, C2, dtype=jnp.int32)

    loss2 = cross_entropy_loss(output2, target2, tile_n=128)
    jax.block_until_ready(loss2)
    ref2 = _reference(output2, target2)
    assert jnp.allclose(loss2, ref2, atol=2e-2, rtol=2e-2), (loss2, ref2)

    print("KERNEL_OK")
</pallas_src>

<mosaic_0001>
module attributes {stable_mosaic.version = 11 : i64} {
  func.func @_ce_partial_kernel(%arg0: i32, %arg1: memref<10x8xf32, #tpu.memory_space<vmem>>, %arg2: memref<1x8xi32, #tpu.memory_space<vmem>>, %arg3: memref<1x1x128xf32, #tpu.memory_space<vmem>>) attributes {dimension_semantics = [#tpu.dimension_semantics<parallel>], iteration_bounds = array<i64: 1>, scalar_prefetch = 0 : i64, scratch_operands = 0 : i64, tpu.core_type = #tpu.core_type<tc>, window_params = [{transform_indices = @transform_0, window_bounds = array<i64: 10, 8>}, {transform_indices = @transform_1, window_bounds = array<i64: 1, 8>}, {transform_indices = @transform_2, window_bounds = array<i64: 1, 1, 128>}]} {
    %c0 = arith.constant 0 : index
    %c0_0 = arith.constant 0 : index
    %0 = vector.load %arg1[%c0, %c0_0] : memref<10x8xf32, #tpu.memory_space<vmem>>, vector<10x8xf32>
    %c0_1 = arith.constant 0 : index
    %c0_2 = arith.constant 0 : index
    %1 = vector.load %arg2[%c0_1, %c0_2] : memref<1x8xi32, #tpu.memory_space<vmem>>, vector<1x8xi32>
    %cst = arith.constant dense<0xFF800000> : vector<8xf32>
    %2 = vector.multi_reduction <maximumf>, %0, %cst [0] : vector<10x8xf32> to vector<8xf32>
    %3 = vector.shape_cast %2 : vector<8xf32> to vector<1x8xf32>
    %4 = vector.broadcast %3 : vector<1x8xf32> to vector<10x8xf32>
    %5 = arith.subf %0, %4 : vector<10x8xf32>
    %6 = tpu.iota {dimensions = array<i32: 0>} : vector<10x8xi32>
    %7 = vector.broadcast %1 : vector<1x8xi32> to vector<10x8xi32>
    %8 = arith.cmpi eq, %6, %7 : vector<10x8xi32>
    %cst_3 = arith.constant 0.000000e+00 : f32
    %9 = vector.broadcast %cst_3 : f32 to vector<10x8xf32>
    %10 = arith.select %8, %5, %9 : vector<10x8xi1>, vector<10x8xf32>
    %cst_4 = arith.constant dense<0.000000e+00> : vector<8xf32>
    %11 = vector.multi_reduction <add>, %10, %cst_4 [0] : vector<10x8xf32> to vector<8xf32>
    %12 = vector.shape_cast %11 : vector<8xf32> to vector<1x8xf32>
    %13 = math.exp %5 : vector<10x8xf32>
    %cst_5 = arith.constant dense<0.000000e+00> : vector<8xf32>
    %14 = vector.multi_reduction <add>, %13, %cst_5 [0] : vector<10x8xf32> to vector<8xf32>
    %15 = vector.shape_cast %14 : vector<8xf32> to vector<1x8xf32>
    %16 = math.log %15 : vector<1x8xf32>
    %17 = arith.subf %16, %12 : vector<1x8xf32>
    %c0_i32 = arith.constant 0 : i32
    %18 = arith.cmpi ne, %arg0, %c0_i32 : i32
    %19 = arith.extui %18 : i1 to i32
    %c0_i32_6 = arith.constant 0 : i32
    %20 = arith.cmpi ne, %19, %c0_i32_6 : i32
    scf.if %20 {
      %24 = tpu.iota {dimensions = array<i32: 2>} : vector<1x1x128xi32>
      %c0_i32_9 = arith.constant 0 : i32
      %25 = vector.broadcast %c0_i32_9 : i32 to vector<1x1x128xi32>
      %26 = arith.cmpi eq, %24, %25 : vector<1x1x128xi32>
      %27 = vector.shape_cast %17 : vector<1x8xf32> to vector<1x1x8xf32>
      %cst_10 = arith.constant dense<0.000000e+00> : vector<1xf32>
      %28 = vector.multi_reduction <add>, %27, %cst_10 [1, 2] : vector<1x1x8xf32> to vector<1xf32>
      %29 = vector.shape_cast %28 : vector<1xf32> to vector<1x1x1xf32>
      %30 = vector.extract %29[0, 0, 0] : f32 from vector<1x1x1xf32>
      %cst_11 = arith.constant 0.000000e+00 : f32
      %31 = vector.broadcast %30 : f32 to vector<1x1x128xf32>
      %32 = vector.broadcast %cst_11 : f32 to vector<1x1x128xf32>
      %33 = arith.select %26, %31, %32 : vector<1x1x128xi1>, vector<1x1x128xf32>
      %c0_12 = arith.constant 0 : index
      %c0_13 = arith.constant 0 : index
      %c0_14 = arith.constant 0 : index
      %34 = vector.load %arg3[%c0_12, %c0_13, %c0_14] : memref<1x1x128xf32, #tpu.memory_space<vmem>>, vector<1x1x128xf32>
      tpu.vector_store %arg3[%c0_12, %c0_13, %c0_14], %33 {strides = array<i32>} : memref<1x1x128xf32, #tpu.memory_space<vmem>>, vector<1x1x128xf32>,
    } else {
    }
    %c0_i32_7 = arith.constant 0 : i32
    %21 = arith.cmpi eq, %arg0, %c0_i32_7 : i32
    %22 = arith.extui %21 : i1 to i32
    %c0_i32_8 = arith.constant 0 : i32
    %23 = arith.cmpi ne, %22, %c0_i32_8 : i32
    scf.if %23 {
      %24 = tpu.iota {dimensions = array<i32: 1>} : vector<1x8xi32>
      %c8_i32 = arith.constant 8 : i32
      %25 = arith.muli %arg0, %c8_i32 : i32
      %26 = vector.broadcast %25 : i32 to vector<1x8xi32>
      %27 = arith.addi %24, %26 : vector<1x8xi32>
      %c8_i32_9 = arith.constant 8 : i32
      %28 = vector.broadcast %c8_i32_9 : i32 to vector<1x8xi32>
      %29 = arith.cmpi slt, %27, %28 : vector<1x8xi32>
      %cst_10 = arith.constant 0.000000e+00 : f32
      %30 = vector.broadcast %cst_10 : f32 to vector<1x8xf32>
      %31 = arith.select %29, %17, %30 : vector<1x8xi1>, vector<1x8xf32>
      %32 = tpu.iota {dimensions = array<i32: 2>} : vector<1x1x128xi32>
      %c0_i32_11 = arith.constant 0 : i32
      %33 = vector.broadcast %c0_i32_11 : i32 to vector<1x1x128xi32>
      %34 = arith.cmpi eq, %32, %33 : vector<1x1x128xi32>
      %35 = vector.shape_cast %31 : vector<1x8xf32> to vector<1x1x8xf32>
      %cst_12 = arith.constant dense<0.000000e+00> : vector<1xf32>
      %36 = vector.multi_reduction <add>, %35, %cst_12 [1, 2] : vector<1x1x8xf32> to vector<1xf32>
      %37 = vector.shape_cast %36 : vector<1xf32> to vector<1x1x1xf32>
      %38 = vector.extract %37[0, 0, 0] : f32 from vector<1x1x1xf32>
      %cst_13 = arith.constant 0.000000e+00 : f32
      %39 = vector.broadcast %38 : f32 to vector<1x1x128xf32>
      %40 = vector.broadcast %cst_13 : f32 to vector<1x1x128xf32>
      %41 = arith.select %34, %39, %40 : vector<1x1x128xi1>, vector<1x1x128xf32>
      %c0_14 = arith.constant 0 : index
      %c0_15 = arith.constant 0 : index
      %c0_16 = arith.constant 0 : index
      %42 = vector.load %arg3[%c0_14, %c0_15, %c0_16] : memref<1x1x128xf32, #tpu.memory_space<vmem>>, vector<1x1x128xf32>
      tpu.vector_store %arg3[%c0_14, %c0_15, %c0_16], %41 {strides = array<i32>} : memref<1x1x128xf32, #tpu.memory_space<vmem>>, vector<1x1x128xf32>,
    } else {
    }
    return
  }
  func.func @transform_0(%arg0: i32) -> (i32, i32) {
    %c0_i32 = arith.constant 0 : i32
    %c0_i32_0 = arith.constant 0 : i32
    return %c0_i32, %arg0 : i32, i32
  }
  func.func @transform_1(%arg0: i32) -> (i32, i32) {
    %c0_i32 = arith.constant 0 : i32
    %c0_i32_0 = arith.constant 0 : i32
    return %c0_i32, %arg0 : i32, i32
  }
  func.func @transform_2(%arg0: i32) -> (i32, i32, i32) {
    %c0_i32 = arith.constant 0 : i32
    %c0_i32_0 = arith.constant 0 : i32
    %c0_i32_1 = arith.constant 0 : i32
    return %arg0, %c0_i32, %c0_i32_0 : i32, i32, i32
  }
}

</mosaic_0001>

<llo_original>
// kernel: tpu_custom_call.1
$region0: #{tpu_custom_call.1}
  #allocation0 [shape = 'u32[]', space=smem, size = 0x4, offset = 0x4, fixed_abs, tag = 'smem constant byte address 0x4 - core index']
  #allocation1 [shape = 'u32[72,128]{1,0:T(1,128)}', space=vmem, size = 0x9000, scoped, tag = 'internal scratch']
  %s0 = inlined_call_operand.vmem [shape: f32[10,8], index: 0, kind: input, shape index: {}]
  %s1 = inlined_call_operand.vmem [shape: s32[1,8], index: 1, kind: input, shape index: {}]
  %s2 = inlined_call_operand.hbm [shape: f32[1,1,128], index: 2, kind: output, shape index: {}]
  %s3 = sld [smem:[#allocation0]]
  $region26: #{tpu_custom_call.1} parent=0
    _
  %s5 = ssub.s32 1, %s3
  %s6 = scalar_select 0, %s5, %s3
  $region1: #{tpu_custom_call.1} parent=0
    #allocation2 [shape = 'u8[512]{0}', space=vmem, size = 0x400, scoped, tag = 'output window, operand 0, single buffered']
    #allocation3 [shape = 's32[1]{0}', space=sflag, size = 0x4, scoped, tag = 'scoped memory for tpu_custom_call.1']
    %7 = vsyncpa [#allocation3], 0
    // Predicated region
    $region2: #{tpu_custom_call.1} parent=1 // pred_check
      _
    $region3: #{tpu_custom_call.1} parent=1 // pred_check_branch
      %9 = sbr.rel (0) target = $region5
    $region4: #{tpu_custom_call.1} parent=1 // pred_region
      _
    $region5: #{tpu_custom_call.1} parent=1 // pred_fallthru
      _
    // Predicated region
    $region6: #{tpu_custom_call.1} parent=1 // pred_check
      _
    $region7: #{tpu_custom_call.1} parent=1 // pred_check_branch
      %11 = sbr.rel (0) target = $region9
    $region8: #{tpu_custom_call.1} parent=1 // pred_region
      _
    $region9: #{tpu_custom_call.1} parent=1 // pred_fallthru
      _
    %v12 = vld [vmem:[%s0] sm:$0xff]
    %v13 = vld [vmem:[%s0 + $0x8] sm:$0x3]
    %v14 = vld [vmem:[%s1] sm:$0x1]
    %vm15 = vcmask 64512
    %v16 = vsel %vm15, %v12, -inf
    %vm17 = vcmask 58368
    %v18 = vsel %vm17, %v13, -inf
    %v19 = vmax.f32 %v16, %v18
    %v20 = vrot.slane %v19, 4
    %v21 = vmax.f32 %v19, %v20
    %v22 = vrot.slane %v21, 2
    %v23 = vmax.f32 %v21, %v22
    %v24 = vrot.slane %v23, 1
    %v25 = vmax.f32 %v23, %v24
    %v26 = vsub.f32 %v12, %v25
    %v27 = vsub.f32 %v13, %v25
    %v28 = vlaneseq
    %v29 = vshrl.u32 %v28, 7
    %v30 = vadd.s32 %v29, 8
    %v31 = vperm.slane %v14, 0
    %vm32 = vcmp.eq.s32.totalorder %v29, %v31
    %vm33 = vcmp.eq.s32.totalorder %v30, %v31
    %v34 = vsel %vm32, %v26, 0.0
    %v35 = vsel %vm33, %v27, 0.0
    %v36 = vsel %vm15, %v34, 0.0
    %v37 = vsel %vm17, %v35, 0.0
    %v38 = vadd.f32 %v36, %v37
    %v39 = vrot.slane %v38, 4
    %v40 = vadd.f32 %v38, %v39
    %v41 = vrot.slane %v40, 2
    %v42 = vadd.f32 %v40, %v41
    %v43 = vrot.slane %v42, 1
    %v44 = vadd.f32 %v42, %v43
    %v45 = vmul.f32 %v26, 1.442695
    %v46 = vpow.pop %v45
    %v47 = vmul.f32 %v27, 1.442695
    %v48 = vpow.pop %v47
    %v49 = vsel %vm15, %v46, 0.0
    %v50 = vsel %vm17, %v48, 0.0
    %v51 = vadd.f32 %v49, %v50
    %v52 = vrot.slane %v51, 4
    %v53 = vadd.f32 %v51, %v52
    %v54 = vrot.slane %v53, 2
    %v55 = vadd.f32 %v53, %v54
    %v56 = vrot.slane %v55, 1
    %v57 = vadd.f32 %v55, %v56
    %v58 = vlog2.pop %v57
    %v59 = vmul.f32 %v58, 0.6931472
    %v60 = vsub.f32 %v59, %v44
    %p61 = scmp.ne.s32.totalorder 0, 0
    // Predicated region
    $region10: #{tpu_custom_call.1} parent=1 // pred_check
      %p62 = pneg %p61
    $region11: #{tpu_custom_call.1} parent=1 // pred_check_branch
      %64 = sbr.rel (%p62) target = $region13
    $region12: #{tpu_custom_call.1} parent=1 // pred_region
      %v65 = vlaneseq
      %v66 = vand.u32 %v65, 127
      %vm67 = vcmp.eq.s32.totalorder %v66, 0
      %vm68 = vcmask 57344
      %v69 = vsel %vm68, %v60, 0.0
      %70 = vadd.xlane.f32.xlu0 %v69
      %v71 = vpop.xlane.xlu0 %70
      %v72 = vrot.slane %v71, 4
      %v73 = vadd.f32 %v71, %v72
      %v74 = vrot.slane %v73, 2
      %v75 = vadd.f32 %v73, %v74
      %v76 = vrot.slane %v75, 1
      %v77 = vadd.f32 %v75, %v76
      %s78 = vtos %v77
      %v79 = vstv %s78
      %v80 = vsel %vm67, %v79, 0.0
      %81 = vst [vmem:[#allocation2] sm:$0x1] %v80
    $region13: #{tpu_custom_call.1} parent=1 // pred_fallthru
      _
    %p82 = scmp.eq.s32.totalorder 0, 0
    // Predicated region
    $region14: #{tpu_custom_call.1} parent=1 // pred_check
      %p83 = pneg %p82
    $region15: #{tpu_custom_call.1} parent=1 // pred_check_branch
      %85 = sbr.rel (%p83) target = $region17
    $region16: #{tpu_custom_call.1} parent=1 // pred_region
      %v86 = vlaneseq
      %v87 = vand.u32 %v86, 127
      %s88 = smul.u32 0, 8
      %v89 = vstv %s88
      %v90 = vadd.s32 %v87, %v89
      %vm91 = vcmp.lt.s32.totalorder %v90, 8
      %v92 = vsel %vm91, %v60, 0.0
      %vm93 = vcmp.eq.s32.totalorder %v87, 0
      %vm94 = vcmask 57344
      %v95 = vsel %vm94, %v92, 0.0
      %96 = vadd.xlane.f32.xlu0 %v95
      %v97 = vpop.xlane.xlu0 %96
      %v98 = vrot.slane %v97, 4
      %v99 = vadd.f32 %v97, %v98
      %v100 = vrot.slane %v99, 2
      %v101 = vadd.f32 %v99, %v100
      %v102 = vrot.slane %v101, 1
      %v103 = vadd.f32 %v101, %v102
      %s104 = vtos %v103
      %v105 = vstv %s104
      %v106 = vsel %vm93, %v105, 0.0
      %107 = vst [vmem:[#allocation2] sm:$0x1] %v106
    $region17: #{tpu_custom_call.1} parent=1 // pred_fallthru
      _
    // Predicated region
    $region18: #{tpu_custom_call.1} parent=1 // pred_check
      _
    $region19: #{tpu_custom_call.1} parent=1 // pred_check_branch
      %109 = sbr.rel (0) target = $region21
    $region20: #{tpu_custom_call.1} parent=1 // pred_region
      %111 = vsyncadd [#allocation3], 0
      %s113 = sshll.u32 [#allocation2], 4
      %s114 = int_to_ptr.vmem [resolvable:$true] %s113
      %s115 = sshll.u32 %s2, 4
      %s116 = int_to_ptr.hbm [resolvable:$true] %s115
      %118 = dma.vmem_to_hbm [thread:$0]  %s114, 16, %s116, [#allocation3]
    $region21: #{tpu_custom_call.1} parent=1 // pred_fallthru
      _
    // Predicated region
    $region22: #{tpu_custom_call.1} parent=1 // pred_check
      _
    $region23: #{tpu_custom_call.1} parent=1 // pred_check_branch
      %120 = sbr.rel (0) target = $region25
    $region24: #{tpu_custom_call.1} parent=1 // pred_region
      %122 = dma.done [#allocation3], 16
    $region25: #{tpu_custom_call.1} parent=1 // pred_fallthru
      _
    %123 = vsyncpa [#allocation3], 1

</llo_original>
